<compile_context>
chip_gen: v7x
topology: tpu7x:2x2x1
jax: 0.10.0
libtpu: 0.0.40
codegen_flags: <defaults>
</compile_context>

<pallas_src>
import functools

import jax
import jax.numpy as jnp
import numpy as np
from jax import lax
from jax.experimental import pallas as pl
from jax.experimental.pallas import tpu as pltpu


def _round_up(x, m):
    return (x + m - 1) // m * m


def _conv_bias_prelu_kernel(x_ref, w_ref, ba_ref, out_ref, taps_ref, *,
                            W, R, c_in, c_out, cin_pad):
    """One (image, row-tile) step of 3x3 conv (pad=1) + bias + PReLU.

    x_ref    : (c_in,  N_pad)      bf16  whole zero-padded flat image (resident)
    w_ref    : (c_out, 9*cin_pad)  bf16  tap-major packed conv weights
    ba_ref   : (c_out+1, 1)        f32   conv bias rows + PReLU alpha last row
    out_ref  : (c_out, R*W)        f32   this row-tile of the conv output
    taps_ref : (9*cin_pad, R*W)    bf16  VMEM scratch holding the 9 shifted taps
    """
    t = pl.program_id(1)
    L = R * W                      # output lanes in this tile
    HL = (R + 2) * W + 2           # halo lanes: tile rows +/- 1 row, +/- 1 lane

    base = t * L
    if L % 128 == 0:
        base = pl.multiple_of(base, 128)
    # Halo slice covering image rows [t*R - 1, t*R + R + 1) plus one lane on each
    # side for the dw = +/-1 taps.  The wrapper's (W+1)-lane zero padding keeps
    # this in bounds and makes out-of-image rows read zeros (= conv zero pad).
    xh = x_ref[:, pl.ds(base, HL)]                         # (c_in, HL) bf16

    # Column-boundary masks, computed once per step (hoisted out of the tap loop).
    col = lax.broadcasted_iota(jnp.int32, (1, L), 1) % W
    mask_l = col >= 1              # valid source pixel exists for dw = -1
    mask_r = col < (W - 1)         # valid source pixel exists for dw = +1
    zero = jnp.zeros((), xh.dtype)

    # Build the nine shifted/masked taps straight into the sublane-aligned scratch
    # (no concatenate copy).  Padded channel rows are kept at zero every step so
    # uninitialized VMEM can never leak NaNs into the f32 accumulation.
    pad_rows = cin_pad - c_in
    tap = 0
    for dh in (-1, 0, 1):
        for dw in (-1, 0, 1):
            off = (dh + 1) * W + dw + 1                    # static per-tap offset
            s = xh[:, off:off + L]                         # (c_in, L)
            if dw == -1:
                s = jnp.where(mask_l, s, zero)
            elif dw == 1:
                s = jnp.where(mask_r, s, zero)
            r0 = tap * cin_pad
            taps_ref[r0:r0 + c_in, :] = s
            if pad_rows:
                taps_ref[r0 + c_in:r0 + cin_pad, :] = jnp.zeros((pad_rows, L), xh.dtype)
            tap += 1

    # Single fused MXU matmul for all nine taps, bf16 x bf16 -> f32 accumulation.
    y = jnp.dot(w_ref[...], taps_ref[...], preferred_element_type=jnp.float32)

    # f32 epilogue: conv bias + PReLU (single shared alpha, commutes with shuffle).
    y = y + ba_ref[0:c_out, :]
    alpha = ba_ref[c_out:c_out + 1, :]
    y = jnp.where(y >= 0.0, y, alpha * y)

    out_ref[...] = y.astype(out_ref.dtype)


def _pick_row_tile(H, W, cin_pad, c_out, out_itemsize, vmem_budget_bytes=24 << 20):
    """Largest row tile R dividing H whose per-tile live VMEM fits the budget,
    preferring tiles with R*W % 128 == 0 (unmasked, lane-dense output stores).
    The ~24 MiB default budget is sized for v7x (64 MiB physical VMEM); v5e/v6e
    simply get the same comfortably-fitting tile."""
    def live_bytes(R):
        L = R * W
        HL = (R + 2) * W + 2
        return (9 * cin_pad * L * 2                # tap scratch (bf16)
                + cin_pad * HL * 2                 # halo load
                + c_out * L * 4                    # f32 matmul result
                + 2 * c_out * L * out_itemsize)    # double-buffered output block
    divisors = [r for r in range(1, H + 1) if H % r == 0]
    fitting = [r for r in divisors if live_bytes(r) <= vmem_budget_bytes] or [1]
    aligned = [r for r in fitting if (r * W) % 128 == 0]
    return max(aligned) if aligned else max(fitting)


def upsample_block_forward(x_nchw, conv_w, conv_b, prelu_alpha, *, upscale=2,
                           row_tile=None):
    """x: (B, C_in, H, W) NCHW; conv_w: (C_out, C_in, 3, 3); conv_b: (C_out,);
    prelu_alpha: scalar (nn.PReLU() default: single shared parameter)."""
    B, C_in, H, W = x_nchw.shape
    C_out = conv_w.shape[0]
    N = H * W
    out_dtype = x_nchw.dtype
    out_itemsize = jnp.dtype(out_dtype).itemsize

    # Per-tap channel count padded to the bf16 sublane packing (16).
    cin_pad = _round_up(C_in, 16)

    if row_tile is None:
        row_tile = _pick_row_tile(H, W, cin_pad, C_out, out_itemsize)
    assert H % row_tile == 0, "row_tile must divide H"
    R = row_tile
    T = H // R
    L = R * W

    # --- bf16 activations, zero-padded flat spatial (lane) layout -------------
    # (W+1) zero lanes per side give the kernel in-bounds halo slices with the
    # conv's zero padding built in; the pad fuses with the (needed) bf16 cast.
    PADL = W + 1
    N_pad = _round_up(PADL + N + PADL, 128)
    x_flat = x_nchw.reshape(B, C_in, N).astype(jnp.bfloat16)
    x_pad = jnp.pad(x_flat, ((0, 0), (0, 0), (PADL, N_pad - N - PADL)))

    # --- parameter slabs -------------------------------------------------------
    # Weights: (C_out, C_in, 3, 3) -> tap-major (C_out, 9*cin_pad) bf16, padded
    # channel columns zeroed to match the zeroed scratch rows.
    w_tap = jnp.transpose(conv_w, (0, 2, 3, 1))                     # (C_out,3,3,C_in)
    w_tap = jnp.pad(w_tap, ((0, 0), (0, 0), (0, 0), (0, cin_pad - C_in)))
    w_mat = w_tap.reshape(C_out, 9 * cin_pad).astype(jnp.bfloat16)

    # Conv bias + PReLU alpha packed in one small f32 slab (f32 epilogue).
    ba = jnp.concatenate(
        [conv_b.reshape(C_out, 1).astype(jnp.float32),
         jnp.reshape(prelu_alpha, (1, 1)).astype(jnp.float32)], axis=0)  # (C_out+1,1)

    # --- explicit VMEM budget (raise above the 16/32 MiB scoped defaults) ------
    HL = (R + 2) * W + 2
    est_vmem = (2 * C_in * N_pad * 2              # resident/double-buffered image
                + 2 * C_out * L * out_itemsize    # double-buffered output tile
                + 9 * cin_pad * L * 2             # tap scratch
                + 2 * C_out * 9 * cin_pad * 2     # weight slab
                + C_in * HL * 2 + C_out * L * 4)  # halo load + f32 result
    vmem_limit = int(min(64 << 20, max(16 << 20, 2 * est_vmem)))

    kernel = functools.partial(
        _conv_bias_prelu_kernel,
        W=W, R=R, c_in=C_in, c_out=C_out, cin_pad=cin_pad)

    y_flat = pl.pallas_call(
        kernel,
        out_shape=jax.ShapeDtypeStruct((B, C_out, N), out_dtype),
        grid_spec=pltpu.PrefetchScalarGridSpec(
            num_scalar_prefetch=0,
            grid=(B, T),                           # t innermost -> image block stays resident
            in_specs=[
                pl.BlockSpec((None, C_in, N_pad), lambda b, t: (b, 0, 0)),
                pl.BlockSpec((C_out, 9 * cin_pad), lambda b, t: (0, 0)),
                pl.BlockSpec((C_out + 1, 1), lambda b, t: (0, 0)),
            ],
            out_specs=pl.BlockSpec((None, C_out, L), lambda b, t: (b, 0, t)),
            scratch_shapes=[pltpu.VMEM((9 * cin_pad, L), jnp.bfloat16)],
        ),
        compiler_params=pltpu.CompilerParams(
            dimension_semantics=("parallel", "parallel"),
            vmem_limit_bytes=vmem_limit),
    )(x_pad, w_mat, ba)

    # PixelShuffle(2): pure index permutation of already-PReLU'd values.
    # TODO(synk): in a full network this permutation (one extra HBM read+write of
    # the output) should be fused into the consumer or the output kept grouped as
    # (B, Cq, r*r, H, W); doing the interleave in-kernel would only add XLU lane
    # permutes with zero arithmetic benefit.
    r = upscale
    Cq = C_out // (r * r)
    y = y_flat.reshape(B, Cq, r, r, H, W)
    y = jnp.transpose(y, (0, 1, 4, 2, 5, 3)).reshape(B, Cq, H * r, W * r)
    return y


def ref_forward(x, conv_w, conv_b, prelu_alpha):
    """Pure-JAX reference mirroring the PyTorch module (f32, exact conv)."""
    y = lax.conv_general_dilated(
        x, conv_w, window_strides=(1, 1), padding=((1, 1), (1, 1)),
        dimension_numbers=("NCHW", "OIHW", "NCHW"),
        precision=lax.Precision.HIGHEST)
    y = y + conv_b[None, :, None, None]
    B, C_out, H, W = y.shape
    r = 2
    Cq = C_out // (r * r)
    y = y.reshape(B, Cq, r, r, H, W).transpose(0, 1, 4, 2, 5, 3).reshape(B, Cq, H * r, W * r)
    return jnp.where(y >= 0, y, prelu_alpha * y)


if __name__ == "__main__":
    key = jax.random.PRNGKey(0)
    k_x, k_w, k_b = jax.random.split(key, 3)

    # Small shapes consistent with the module (out_channels divisible by 4).
    B, C_in, C_out, H, W = 2, 8, 16, 16, 16

    x = jax.random.normal(k_x, (B, C_in, H, W), jnp.float32)
    conv_w = jax.random.normal(k_w, (C_out, C_in, 3, 3), jnp.float32) * 0.2
    conv_b = jax.random.normal(k_b, (C_out,), jnp.float32) * 0.05
    prelu_alpha = jnp.float32(0.25)    # nn.PReLU() default init (single shared param)

    # f32 reference and the same reference with bf16-rounded operands (the kernel
    # uses bf16 operands with exact f32 accumulation, so it should match the
    # latter up to accumulation order).
    ref_f32 = jax.block_until_ready(ref_forward(x, conv_w, conv_b, prelu_alpha))
    x_q = x.astype(jnp.bfloat16).astype(jnp.float32)
    w_q = conv_w.astype(jnp.bfloat16).astype(jnp.float32)
    ref_bf16 = jax.block_until_ready(ref_forward(x_q, w_q, conv_b, prelu_alpha))

    for rt in (None, 8):   # auto row tile (whole image) and a 2-tile halo split
        out = jax.block_until_ready(
            upsample_block_forward(x, conv_w, conv_b, prelu_alpha, row_tile=rt))
        assert out.shape == (B, C_out // 4, 2 * H, 2 * W), out.shape
        np.testing.assert_allclose(np.asarray(out), np.asarray(ref_bf16),
                                   rtol=2e-3, atol=2e-3)
        np.testing.assert_allclose(np.asarray(out), np.asarray(ref_f32),
                                   rtol=5e-2, atol=5e-2)

    print("KERNEL_OK")
</pallas_src>

<mosaic_0001>
module attributes {stable_mosaic.version = 11 : i64} {
  func.func @_conv_bias_prelu_kernel(%arg0: i32, %arg1: i32, %arg2: memref<1x8x384xbf16, #tpu.memory_space<vmem>>, %arg3: memref<16x144xbf16, #tpu.memory_space<vmem>>, %arg4: memref<17x1xf32, #tpu.memory_space<vmem>>, %arg5: memref<1x16x256xf32, #tpu.memory_space<vmem>>, %arg6: memref<144x256xbf16, #tpu.memory_space<vmem>>) attributes {dimension_semantics = [#tpu.dimension_semantics<parallel>, #tpu.dimension_semantics<parallel>], iteration_bounds = array<i64: 2, 1>, scalar_prefetch = 0 : i64, scratch_operands = 1 : i64, tpu.core_type = #tpu.core_type<tc>, window_params = [{transform_indices = @transform_0, window_bounds = array<i64: 1, 8, 384>}, {pipeline_mode = #tpu.pipeline_mode<synchronous>, transform_indices = @transform_1, window_bounds = array<i64: 16, 144>}, {pipeline_mode = #tpu.pipeline_mode<synchronous>, transform_indices = @transform_2, window_bounds = array<i64: 17, 1>}, {transform_indices = @transform_3, window_bounds = array<i64: 1, 16, 256>}]} {
    %c256_i32 = arith.constant 256 : i32
    %0 = arith.muli %arg1, %c256_i32 : i32
    %1 = tpu.assume_multiple %0, 128 : i32
    %c0 = arith.constant 0 : index
    %c0_0 = arith.constant 0 : index
    %2 = arith.index_cast %1 : i32 to index
    %3 = vector.load %arg2[%c0, %c0_0, %2] : memref<1x8x384xbf16, #tpu.memory_space<vmem>>, vector<1x8x290xbf16>
    %4 = vector.shape_cast %3 : vector<1x8x290xbf16> to vector<8x290xbf16>
    %5 = tpu.iota {dimensions = array<i32: 1>} : vector<1x256xi32>
    %c16_i32 = arith.constant 16 : i32
    %c0_i32 = arith.constant 0 : i32
    %6 = arith.cmpi eq, %c16_i32, %c0_i32 : i32
    %c1_i32 = arith.constant 1 : i32
    %7 = arith.select %6, %c1_i32, %c16_i32 : i32
    %8 = vector.broadcast %7 : i32 to vector<1x256xi32>
    %9 = arith.remsi %5, %8 : vector<1x256xi32>
    %c0_i32_1 = arith.constant 0 : i32
    %10 = vector.broadcast %c0_i32_1 : i32 to vector<1x256xi32>
    %11 = arith.cmpi ne, %9, %10 : vector<1x256xi32>
    %c0_i32_2 = arith.constant 0 : i32
    %12 = vector.broadcast %c0_i32_2 : i32 to vector<1x256xi32>
    %13 = arith.cmpi slt, %9, %12 : vector<1x256xi32>
    %c0_i32_3 = arith.constant 0 : i32
    %14 = arith.cmpi slt, %7, %c0_i32_3 : i32
    %15 = vector.broadcast %14 : i1 to vector<1x256xi1>
    %16 = vector.broadcast %15 : vector<1x256xi1> to vector<1x256xi1>
    %17 = arith.xori %13, %16 : vector<1x256xi1>
    %18 = arith.andi %17, %11 : vector<1x256xi1>
    %19 = vector.broadcast %7 : i32 to vector<1x256xi32>
    %20 = arith.addi %9, %19 : vector<1x256xi32>
    %21 = arith.select %18, %20, %9 : vector<1x256xi1>, vector<1x256xi32>
    %c1_i32_4 = arith.constant 1 : i32
    %22 = vector.broadcast %c1_i32_4 : i32 to vector<1x256xi32>
    %23 = arith.cmpi sge, %21, %22 : vector<1x256xi32>
    %c15_i32 = arith.constant 15 : i32
    %24 = vector.broadcast %c15_i32 : i32 to vector<1x256xi32>
    %25 = arith.cmpi slt, %21, %24 : vector<1x256xi32>
    %26 = vector.extract_strided_slice %4 {offsets = [0, 0], sizes = [8, 256], strides = [1, 1]} : vector<8x290xbf16> to vector<8x256xbf16>
    %cst = arith.constant 0.000000e+00 : bf16
    %27 = vector.shape_cast %23 : vector<1x256xi1> to vector<1x256xi1>
    %28 = vector.broadcast %27 : vector<1x256xi1> to vector<8x256xi1>
    %29 = vector.broadcast %cst : bf16 to vector<8x256xbf16>
    %30 = arith.select %28, %26, %29 : vector<8x256xi1>, vector<8x256xbf16>
    %c0_5 = arith.constant 0 : index
    %c0_6 = arith.constant 0 : index
    %31 = vector.load %arg6[%c0_5, %c0_6] : memref<144x256xbf16, #tpu.memory_space<vmem>>, vector<8x256xbf16>
    tpu.vector_store %arg6[%c0_5, %c0_6], %30 {strides = array<i32>} : memref<144x256xbf16, #tpu.memory_space<vmem>>, vector<8x256xbf16>,
    %cst_7 = arith.constant 0.000000e+00 : bf16
    %32 = vector.broadcast %cst_7 : bf16 to vector<8x256xbf16>
    %c8 = arith.constant 8 : index
    %c0_8 = arith.constant 0 : index
    %33 = vector.load %arg6[%c8, %c0_8] : memref<144x256xbf16, #tpu.memory_space<vmem>>, vector<8x256xbf16>
    tpu.vector_store %arg6[%c8, %c0_8], %32 {strides = array<i32>} : memref<144x256xbf16, #tpu.memory_space<vmem>>, vector<8x256xbf16>,
    %34 = vector.extract_strided_slice %4 {offsets = [0, 1], sizes = [8, 256], strides = [1, 1]} : vector<8x290xbf16> to vector<8x256xbf16>
    %c16 = arith.constant 16 : index
    %c0_9 = arith.constant 0 : index
    %35 = vector.load %arg6[%c16, %c0_9] : memref<144x256xbf16, #tpu.memory_space<vmem>>, vector<8x256xbf16>
    tpu.vector_store %arg6[%c16, %c0_9], %34 {strides = array<i32>} : memref<144x256xbf16, #tpu.memory_space<vmem>>, vector<8x256xbf16>,
    %cst_10 = arith.constant 0.000000e+00 : bf16
    %36 = vector.broadcast %cst_10 : bf16 to vector<8x256xbf16>
    %c24 = arith.constant 24 : index
    %c0_11 = arith.constant 0 : index
    %37 = vector.load %arg6[%c24, %c0_11] : memref<144x256xbf16, #tpu.memory_space<vmem>>, vector<8x256xbf16>
    tpu.vector_store %arg6[%c24, %c0_11], %36 {strides = array<i32>} : memref<144x256xbf16, #tpu.memory_space<vmem>>, vector<8x256xbf16>,
    %38 = vector.extract_strided_slice %4 {offsets = [0, 2], sizes = [8, 256], strides = [1, 1]} : vector<8x290xbf16> to vector<8x256xbf16>
    %cst_12 = arith.constant 0.000000e+00 : bf16
    %39 = vector.shape_cast %25 : vector<1x256xi1> to vector<1x256xi1>
    %40 = vector.broadcast %39 : vector<1x256xi1> to vector<8x256xi1>
    %41 = vector.broadcast %cst_12 : bf16 to vector<8x256xbf16>
    %42 = arith.select %40, %38, %41 : vector<8x256xi1>, vector<8x256xbf16>
    %c32 = arith.constant 32 : index
    %c0_13 = arith.constant 0 : index
    %43 = vector.load %arg6[%c32, %c0_13] : memref<144x256xbf16, #tpu.memory_space<vmem>>, vector<8x256xbf16>
    tpu.vector_store %arg6[%c32, %c0_13], %42 {strides = array<i32>} : memref<144x256xbf16, #tpu.memory_space<vmem>>, vector<8x256xbf16>,
    %cst_14 = arith.constant 0.000000e+00 : bf16
    %44 = vector.broadcast %cst_14 : bf16 to vector<8x256xbf16>
    %c40 = arith.constant 40 : index
    %c0_15 = arith.constant 0 : index
    %45 = vector.load %arg6[%c40, %c0_15] : memref<144x256xbf16, #tpu.memory_space<vmem>>, vector<8x256xbf16>
    tpu.vector_store %arg6[%c40, %c0_15], %44 {strides = array<i32>} : memref<144x256xbf16, #tpu.memory_space<vmem>>, vector<8x256xbf16>,
    %46 = vector.extract_strided_slice %4 {offsets = [0, 16], sizes = [8, 256], strides = [1, 1]} : vector<8x290xbf16> to vector<8x256xbf16>
    %cst_16 = arith.constant 0.000000e+00 : bf16
    %47 = vector.shape_cast %23 : vector<1x256xi1> to vector<1x256xi1>
    %48 = vector.broadcast %47 : vector<1x256xi1> to vector<8x256xi1>
    %49 = vector.broadcast %cst_16 : bf16 to vector<8x256xbf16>
    %50 = arith.select %48, %46, %49 : vector<8x256xi1>, vector<8x256xbf16>
    %c48 = arith.constant 48 : index
    %c0_17 = arith.constant 0 : index
    %51 = vector.load %arg6[%c48, %c0_17] : memref<144x256xbf16, #tpu.memory_space<vmem>>, vector<8x256xbf16>
    tpu.vector_store %arg6[%c48, %c0_17], %50 {strides = array<i32>} : memref<144x256xbf16, #tpu.memory_space<vmem>>, vector<8x256xbf16>,
    %cst_18 = arith.constant 0.000000e+00 : bf16
    %52 = vector.broadcast %cst_18 : bf16 to vector<8x256xbf16>
    %c56 = arith.constant 56 : index
    %c0_19 = arith.constant 0 : index
    %53 = vector.load %arg6[%c56, %c0_19] : memref<144x256xbf16, #tpu.memory_space<vmem>>, vector<8x256xbf16>
    tpu.vector_store %arg6[%c56, %c0_19], %52 {strides = array<i32>} : memref<144x256xbf16, #tpu.memory_space<vmem>>, vector<8x256xbf16>,
    %54 = vector.extract_strided_slice %4 {offsets = [0, 17], sizes = [8, 256], strides = [1, 1]} : vector<8x290xbf16> to vector<8x256xbf16>
    %c64 = arith.constant 64 : index
    %c0_20 = arith.constant 0 : index
    %55 = vector.load %arg6[%c64, %c0_20] : memref<144x256xbf16, #tpu.memory_space<vmem>>, vector<8x256xbf16>
    tpu.vector_store %arg6[%c64, %c0_20], %54 {strides = array<i32>} : memref<144x256xbf16, #tpu.memory_space<vmem>>, vector<8x256xbf16>,
    %cst_21 = arith.constant 0.000000e+00 : bf16
    %56 = vector.broadcast %cst_21 : bf16 to vector<8x256xbf16>
    %c72 = arith.constant 72 : index
    %c0_22 = arith.constant 0 : index
    %57 = vector.load %arg6[%c72, %c0_22] : memref<144x256xbf16, #tpu.memory_space<vmem>>, vector<8x256xbf16>
    tpu.vector_store %arg6[%c72, %c0_22], %56 {strides = array<i32>} : memref<144x256xbf16, #tpu.memory_space<vmem>>, vector<8x256xbf16>,
    %58 = vector.extract_strided_slice %4 {offsets = [0, 18], sizes = [8, 256], strides = [1, 1]} : vector<8x290xbf16> to vector<8x256xbf16>
    %cst_23 = arith.constant 0.000000e+00 : bf16
    %59 = vector.shape_cast %25 : vector<1x256xi1> to vector<1x256xi1>
    %60 = vector.broadcast %59 : vector<1x256xi1> to vector<8x256xi1>
    %61 = vector.broadcast %cst_23 : bf16 to vector<8x256xbf16>
    %62 = arith.select %60, %58, %61 : vector<8x256xi1>, vector<8x256xbf16>
    %c80 = arith.constant 80 : index
    %c0_24 = arith.constant 0 : index
    %63 = vector.load %arg6[%c80, %c0_24] : memref<144x256xbf16, #tpu.memory_space<vmem>>, vector<8x256xbf16>
    tpu.vector_store %arg6[%c80, %c0_24], %62 {strides = array<i32>} : memref<144x256xbf16, #tpu.memory_space<vmem>>, vector<8x256xbf16>,
    %cst_25 = arith.constant 0.000000e+00 : bf16
    %64 = vector.broadcast %cst_25 : bf16 to vector<8x256xbf16>
    %c88 = arith.constant 88 : index
    %c0_26 = arith.constant 0 : index
    %65 = vector.load %arg6[%c88, %c0_26] : memref<144x256xbf16, #tpu.memory_space<vmem>>, vector<8x256xbf16>
    tpu.vector_store %arg6[%c88, %c0_26], %64 {strides = array<i32>} : memref<144x256xbf16, #tpu.memory_space<vmem>>, vector<8x256xbf16>,
    %66 = vector.extract_strided_slice %4 {offsets = [0, 32], sizes = [8, 256], strides = [1, 1]} : vector<8x290xbf16> to vector<8x256xbf16>
    %cst_27 = arith.constant 0.000000e+00 : bf16
    %67 = vector.shape_cast %23 : vector<1x256xi1> to vector<1x256xi1>
    %68 = vector.broadcast %67 : vector<1x256xi1> to vector<8x256xi1>
    %69 = vector.broadcast %cst_27 : bf16 to vector<8x256xbf16>
    %70 = arith.select %68, %66, %69 : vector<8x256xi1>, vector<8x256xbf16>
    %c96 = arith.constant 96 : index
    %c0_28 = arith.constant 0 : index
    %71 = vector.load %arg6[%c96, %c0_28] : memref<144x256xbf16, #tpu.memory_space<vmem>>, vector<8x256xbf16>
    tpu.vector_store %arg6[%c96, %c0_28], %70 {strides = array<i32>} : memref<144x256xbf16, #tpu.memory_space<vmem>>, vector<8x256xbf16>,
    %cst_29 = arith.constant 0.000000e+00 : bf16
    %72 = vector.broadcast %cst_29 : bf16 to vector<8x256xbf16>
    %c104 = arith.constant 104 : index
    %c0_30 = arith.constant 0 : index
    %73 = vector.load %arg6[%c104, %c0_30] : memref<144x256xbf16, #tpu.memory_space<vmem>>, vector<8x256xbf16>
    tpu.vector_store %arg6[%c104, %c0_30], %72 {strides = array<i32>} : memref<144x256xbf16, #tpu.memory_space<vmem>>, vector<8x256xbf16>,
    %74 = vector.extract_strided_slice %4 {offsets = [0, 33], sizes = [8, 256], strides = [1, 1]} : vector<8x290xbf16> to vector<8x256xbf16>
    %c112 = arith.constant 112 : index
    %c0_31 = arith.constant 0 : index
    %75 = vector.load %arg6[%c112, %c0_31] : memref<144x256xbf16, #tpu.memory_space<vmem>>, vector<8x256xbf16>
    tpu.vector_store %arg6[%c112, %c0_31], %74 {strides = array<i32>} : memref<144x256xbf16, #tpu.memory_space<vmem>>, vector<8x256xbf16>,
    %cst_32 = arith.constant 0.000000e+00 : bf16
    %76 = vector.broadcast %cst_32 : bf16 to vector<8x256xbf16>
    %c120 = arith.constant 120 : index
    %c0_33 = arith.constant 0 : index
    %77 = vector.load %arg6[%c120, %c0_33] : memref<144x256xbf16, #tpu.memory_space<vmem>>, vector<8x256xbf16>
    tpu.vector_store %arg6[%c120, %c0_33], %76 {strides = array<i32>} : memref<144x256xbf16, #tpu.memory_space<vmem>>, vector<8x256xbf16>,
    %78 = vector.extract_strided_slice %4 {offsets = [0, 34], sizes = [8, 256], strides = [1, 1]} : vector<8x290xbf16> to vector<8x256xbf16>
    %cst_34 = arith.constant 0.000000e+00 : bf16
    %79 = vector.shape_cast %25 : vector<1x256xi1> to vector<1x256xi1>
    %80 = vector.broadcast %79 : vector<1x256xi1> to vector<8x256xi1>
    %81 = vector.broadcast %cst_34 : bf16 to vector<8x256xbf16>
    %82 = arith.select %80, %78, %81 : vector<8x256xi1>, vector<8x256xbf16>
    %c128 = arith.constant 128 : index
    %c0_35 = arith.constant 0 : index
    %83 = vector.load %arg6[%c128, %c0_35] : memref<144x256xbf16, #tpu.memory_space<vmem>>, vector<8x256xbf16>
    tpu.vector_store %arg6[%c128, %c0_35], %82 {strides = array<i32>} : memref<144x256xbf16, #tpu.memory_space<vmem>>, vector<8x256xbf16>,
    %cst_36 = arith.constant 0.000000e+00 : bf16
    %84 = vector.broadcast %cst_36 : bf16 to vector<8x256xbf16>
    %c136 = arith.constant 136 : index
    %c0_37 = arith.constant 0 : index
    %85 = vector.load %arg6[%c136, %c0_37] : memref<144x256xbf16, #tpu.memory_space<vmem>>, vector<8x256xbf16>
    tpu.vector_store %arg6[%c136, %c0_37], %84 {strides = array<i32>} : memref<144x256xbf16, #tpu.memory_space<vmem>>, vector<8x256xbf16>,
    %c0_38 = arith.constant 0 : index
    %c0_39 = arith.constant 0 : index
    %86 = vector.load %arg3[%c0_38, %c0_39] : memref<16x144xbf16, #tpu.memory_space<vmem>>, vector<16x144xbf16>
    %c0_40 = arith.constant 0 : index
    %c0_41 = arith.constant 0 : index
    %87 = vector.load %arg6[%c0_40, %c0_41] : memref<144x256xbf16, #tpu.memory_space<vmem>>, vector<144x256xbf16>
    %cst_42 = arith.constant dense<0.000000e+00> : vector<16x256xf32>
    %88 = tpu.matmul %86, %87, %cst_42 {dimension_numbers = #tpu.dot_dimension_numbers<[1], [0], [0], [1], [0, 0, 1, 1], [], []>} : vector<16x144xbf16>, vector<144x256xbf16>, vector<16x256xf32> -> vector<16x256xf32>
    %c0_43 = arith.constant 0 : index
    %c0_44 = arith.constant 0 : index
    %89 = vector.load %arg4[%c0_43, %c0_44] : memref<17x1xf32, #tpu.memory_space<vmem>>, vector<16x1xf32>
    %90 = vector.broadcast %89 : vector<16x1xf32> to vector<16x256xf32>
    %91 = arith.addf %88, %90 : vector<16x256xf32>
    %c16_45 = arith.constant 16 : index
    %c0_46 = arith.constant 0 : index
    %92 = vector.load %arg4[%c16_45, %c0_46] : memref<17x1xf32, #tpu.memory_space<vmem>>, vector<1x1xf32>
    %cst_47 = arith.constant 0.000000e+00 : f32
    %93 = vector.broadcast %cst_47 : f32 to vector<16x256xf32>
    %94 = arith.cmpf oge, %91, %93 : vector<16x256xf32>
    %95 = vector.broadcast %92 : vector<1x1xf32> to vector<16x256xf32>
    %96 = arith.mulf %95, %91 : vector<16x256xf32>
    %97 = arith.select %94, %91, %96 : vector<16x256xi1>, vector<16x256xf32>
    %c0_48 = arith.constant 0 : index
    %c0_49 = arith.constant 0 : index
    %c0_50 = arith.constant 0 : index
    %98 = vector.load %arg5[%c0_48, %c0_49, %c0_50] : memref<1x16x256xf32, #tpu.memory_space<vmem>>, vector<1x16x256xf32>
    %99 = vector.shape_cast %98 : vector<1x16x256xf32> to vector<16x256xf32>
    %100 = vector.shape_cast %97 : vector<16x256xf32> to vector<1x16x256xf32>
    tpu.vector_store %arg5[%c0_48, %c0_49, %c0_50], %100 {strides = array<i32>} : memref<1x16x256xf32, #tpu.memory_space<vmem>>, vector<1x16x256xf32>,
    return
  }
  func.func @transform_0(%arg0: i32, %arg1: i32) -> (i32, i32, i32) {
    %c0_i32 = arith.constant 0 : i32
    %c0_i32_0 = arith.constant 0 : i32
    %c0_i32_1 = arith.constant 0 : i32
    return %arg0, %c0_i32, %c0_i32_0 : i32, i32, i32
  }
  func.func @transform_1(%arg0: i32, %arg1: i32) -> (i32, i32) {
    %c0_i32 = arith.constant 0 : i32
    %c0_i32_0 = arith.constant 0 : i32
    %c0_i32_1 = arith.constant 0 : i32
    return %c0_i32, %c0_i32_0 : i32, i32
  }
  func.func @transform_2(%arg0: i32, %arg1: i32) -> (i32, i32) {
    %c0_i32 = arith.constant 0 : i32
    %c0_i32_0 = arith.constant 0 : i32
    %c0_i32_1 = arith.constant 0 : i32
    return %c0_i32, %c0_i32_0 : i32, i32
  }
  func.func @transform_3(%arg0: i32, %arg1: i32) -> (i32, i32, i32) {
    %c0_i32 = arith.constant 0 : i32
    %c0_i32_0 = arith.constant 0 : i32
    return %arg0, %c0_i32, %arg1 : i32, i32, i32
  }
}

</mosaic_0001>

<llo_original>
// kernel: tpu_custom_call.1
$region0: #{tpu_custom_call.1}
  #allocation0 [shape = 'u32[]', space=smem, size = 0x4, offset = 0x4, fixed_abs, tag = 'smem constant byte address 0x4 - core index']
  #allocation1 [shape = 'u32[144,128]{1,0:T(1,128)}', space=vmem, size = 0x12000, scoped, tag = 'internal scratch']
  #allocation2 [shape = 'bf16[144,256]{1,0:T(16,128)(2,1)}', space=vmem, size = 0x12000, scoped, tag = 'scratch operand']
  %s0 = inlined_call_operand.vmem [shape: bf16[2,8,384], index: 0, kind: input, shape index: {}]
  %s1 = inlined_call_operand.hbm [shape: bf16[16,144], index: 1, kind: input, shape index: {}]
  %s2 = inlined_call_operand.vmem [shape: f32[17,1], index: 2, kind: input, shape index: {}]
  %s3 = inlined_call_operand.hbm [shape: f32[2,16,256], index: 3, kind: output, shape index: {}]
  %s4 = sld [smem:[#allocation0]]
  $region49: #{tpu_custom_call.1} parent=0
    _
  %s6 = ssub.s32 1, %s4
  %s7 = scalar_select 0, %s6, %s4
  $region1: #{tpu_custom_call.1} parent=0
    #allocation3 [shape = 'u8[8192]{0}', space=vmem, size = 0x2000, scoped, tag = 'input window, operand 1, single buffered']
    #allocation4 [shape = 's32[2]{0}', space=sflag, size = 0x8, scoped, tag = 'scoped memory for tpu_custom_call.1']
    #allocation5 [shape = 's32[2]{0}', space=sflag, size = 0x8, scoped, tag = 'scoped memory for tpu_custom_call.1']
    #allocation6 [shape = 'u8[32768]{0}', space=vmem, size = 0x8000, scoped, tag = 'output window, operand 0']
    %8 = vsyncpa [#allocation4], 0
    %9 = vsyncpa [#allocation5], 0
    %s10 = scalar_lea.sflag [#allocation5], 1
    %11 = vsyncpa %s10, 0
    loop: start=0, step=1, limit=4
    $region2: #{tpu_custom_call.1} parent=1 // loop_pre_header
      _
    $region3: #{tpu_custom_call.1} parent=1 // loop_header
      %s13 = sphi 0, %s17
      %p14 = scmp.ge.s32.totalorder %s13, 4
      %s20 = sphi 0, %s32
      %s21 = sphi 0, %s28
      %s22 = sphi 0, %s20
      %s23 = sphi 0, %s21
      %s24 = sphi 0, %s22
      %s25 = sphi 0, %s23
      %s35 = sphi 0, %s37
      %s38 = sphi 0, %s35
      %s39 = sphi 0, %s38
      %s55 = sphi 0, %s39
      %s59 = sphi 0, %s59
      %s61 = sphi 0, %s59
      %s62 = sphi 0, %s61
      %s76 = sphi 0, %s62
      %s80 = sphi 0, %s80
      %s82 = sphi 0, %s80
      %s83 = sphi 0, %s82
      %s97 = sphi 0, %s83
      %s105 = sphi 0, %s107
      %s108 = sphi 0, %s105
      %s109 = sphi 0, %s108
      %s125 = sphi 0, %s109
    $region4: #{tpu_custom_call.1} parent=1 // loop_header_branch
      %16 = sbr.rel (%p14) target = $region8
    $region5: #{tpu_custom_call.1} parent=1 // loop_body
      %s18 = ssub.s32 %s13, 1
      %s19 = ssub.s32 %s13, 2
      %s26 = sadd.s32 1, %s21
      %p27 = scmp.ge.s32.totalorder %s26, 1
      %s28 = scalar_select %p27, 0, %s26
      %s29 = sadd.s32 1, %s20
      %s30 = scalar_select %p27, %s29, %s20
      %p31 = scmp.ge.s32.totalorder %s30, 2
      %s32 = scalar_select %p31, 0, %s30
      %s33 = ssub.s32 %s20, %s32
      %p34 = scmp.eq.s32.totalorder %s33, 0
      %s36 = sadd.s32 %s35, 1
      %s37 = scalar_select %p34, %s35, %s36
      %p40 = pneg %p34
      %p41 = scmp.eq.s32.totalorder %s13, 1
      %p42 = por %p40, %p41
      %p43 = scmp.ne.s32.totalorder %s35, %s38
      %p44 = scmp.eq.s32.totalorder %s13, 0
      %p45 = por %p43, %p44
      %p46 = scmp.ne.s32.totalorder %s35, %s38
      %p47 = scmp.eq.s32.totalorder %s18, 1
      %p48 = por %p46, %p47
      %p49 = scmp.ne.s32.totalorder %s38, %s39
      %p50 = scmp.eq.s32.totalorder %s18, 0
      %p51 = por %p49, %p50
      %p52 = scmp.ne.s32.totalorder %s38, %s39
      %p53 = scmp.eq.s32.totalorder %s19, 1
      %p54 = por %p52, %p53
      %p56 = scmp.ne.s32.totalorder %s39, %s55
      %p57 = scmp.eq.s32.totalorder %s19, 0
      %p58 = por %p56, %p57
      %s60 = sadd.s32 %s59, 1
      %p63 = scmp.eq.s32.totalorder %s13, 1
      %p64 = scmp.ne.s32.totalorder %s59, %s61
      %p65 = scmp.eq.s32.totalorder %s13, 0
      %p66 = por %p64, %p65
      %p67 = scmp.ne.s32.totalorder %s59, %s61
      %p68 = scmp.eq.s32.totalorder %s18, 1
      %p69 = por %p67, %p68
      %p70 = scmp.ne.s32.totalorder %s61, %s62
      %p71 = scmp.eq.s32.totalorder %s18, 0
      %p72 = por %p70, %p71
      %p73 = scmp.ne.s32.totalorder %s61, %s62
      %p74 = scmp.eq.s32.totalorder %s19, 1
      %p75 = por %p73, %p74
      %p77 = scmp.ne.s32.totalorder %s62, %s76
      %p78 = scmp.eq.s32.totalorder %s19, 0
      %p79 = por %p77, %p78
      %s81 = sadd.s32 %s80, 1
      %p84 = scmp.eq.s32.totalorder %s13, 1
      %p85 = scmp.ne.s32.totalorder %s80, %s82
      %p86 = scmp.eq.s32.totalorder %s13, 0
      %p87 = por %p85, %p86
      %p88 = scmp.ne.s32.totalorder %s80, %s82
      %p89 = scmp.eq.s32.totalorder %s18, 1
      %p90 = por %p88, %p89
      %p91 = scmp.ne.s32.totalorder %s82, %s83
      %p92 = scmp.eq.s32.totalorder %s18, 0
      %p93 = por %p91, %p92
      %p94 = scmp.ne.s32.totalorder %s82, %s83
      %p95 = scmp.eq.s32.totalorder %s19, 1
      %p96 = por %p94, %p95
      %p98 = scmp.ne.s32.totalorder %s83, %s97
      %p99 = scmp.eq.s32.totalorder %s19, 0
      %p100 = por %p98, %p99
      %s101 = ssub.s32 %s20, %s32
      %s102 = ssub.s32 %s21, %s28
      %s103 = sor.u32 %s101, %s102
      %p104 = scmp.eq.s32.totalorder %s103, 0
      %s106 = sadd.s32 %s105, 1
      %s107 = scalar_select %p104, %s105, %s106
      %p110 = pneg %p104
      %p111 = scmp.eq.s32.totalorder %s13, 1
      %p112 = por %p110, %p111
      %p113 = scmp.ne.s32.totalorder %s105, %s108
      %p114 = scmp.eq.s32.totalorder %s13, 0
      %p115 = por %p113, %p114
      %p116 = scmp.ne.s32.totalorder %s105, %s108
      %p117 = scmp.eq.s32.totalorder %s18, 1
      %p118 = por %p116, %p117
      %p119 = scmp.ne.s32.totalorder %s108, %s109
      %p120 = scmp.eq.s32.totalorder %s18, 0
      %p121 = por %p119, %p120
      %p122 = scmp.ne.s32.totalorder %s108, %s109
      %p123 = scmp.eq.s32.totalorder %s19, 1
      %p124 = por %p122, %p123
      %p126 = scmp.ne.s32.totalorder %s109, %s125
      %p127 = scmp.eq.s32.totalorder %s19, 0
      %p128 = por %p126, %p127
      %p129 = scmp.le.s32.totalorder 1, %s13
      %p130 = scmp.lt.s32.totalorder %s13, 3
      %p131 = pnand %p129, %p130
      %p132 = pneg %p131
      // Predicated region
      $region9: #{tpu_custom_call.1} parent=5 // pred_check
        _
      $region10: #{tpu_custom_call.1} parent=5 // pred_check_branch
        %134 = sbr.rel (%p131) target = $region12
      $region11: #{tpu_custom_call.1} parent=5 // pred_region
        %s135 = ssub.s32 %s13, 1
        // Predicated region
        $region13: #{tpu_custom_call.1} parent=11 // pred_check
          %p136 = pneg %p72
        $region14: #{tpu_custom_call.1} parent=11 // pred_check_branch
          %138 = sbr.rel (%p136) target = $region16
        $region15: #{tpu_custom_call.1} parent=11 // pred_region
          %s140 = ssub.s32 256, 256
          %141 = vsyncadd [#allocation4], %s140
          %s142 = sshll.u32 [#allocation3], 4
          %s143 = int_to_ptr.vmem [resolvable:$true] %s142
          %148 = dma.hbm_to_vmem [thread:$0]  %s1, 256, %s143, [#allocation4], 128, 128, 8
        $region16: #{tpu_custom_call.1} parent=11 // pred_fallthru
          _
        // Predicated region
        $region17: #{tpu_custom_call.1} parent=11 // pred_check
          %p149 = pneg %p93
        $region18: #{tpu_custom_call.1} parent=11 // pred_check_branch
          %151 = sbr.rel (%p149) target = $region20
        $region19: #{tpu_custom_call.1} parent=11 // pred_region
          _
        $region20: #{tpu_custom_call.1} parent=11 // pred_fallthru
          _
      $region12: #{tpu_custom_call.1} parent=5 // pred_fallthru
        _
      %p152 = scmp.lt.s32.totalorder %s13, 2
      // Predicated region
      $region21: #{tpu_custom_call.1} parent=5 // pred_check
        %p153 = pneg %p152
      $region22: #{tpu_custom_call.1} parent=5 // pred_check_branch
        %155 = sbr.rel (%p153) target = $region24
      $region23: #{tpu_custom_call.1} parent=5 // pred_region
        // Predicated region
        $region25: #{tpu_custom_call.1} parent=23 // pred_check
          %p156 = pneg %p45
        $region26: #{tpu_custom_call.1} parent=23 // pred_check_branch
          %158 = sbr.rel (%p156) target = $region28
        $region27: #{tpu_custom_call.1} parent=23 // pred_region
          %p159 = scmp.lt.s32.totalorder %s20, 1
          %s160 = scalar_select %p159, %s20, 1
          %s161 = smul.addr %s160, 3
          %s162 = smul.addr %s161, 4
          %s163 = scalar_lea.vmem %s0, %s162
        $region28: #{tpu_custom_call.1} parent=23 // pred_fallthru
          _
      $region24: #{tpu_custom_call.1} parent=5 // pred_fallthru
        _
      %p164 = scmp.le.s32.totalorder 1, %s13
      %p165 = scmp.lt.s32.totalorder %s13, 3
      %p166 = pnand %p164, %p165
      %p167 = pneg %p166
      // Predicated region
      $region29: #{tpu_custom_call.1} parent=5 // pred_check
        _
      $region30: #{tpu_custom_call.1} parent=5 // pred_check_branch
        %169 = sbr.rel (%p166) target = $region32
      $region31: #{tpu_custom_call.1} parent=5 // pred_region
        %s170 = ssub.s32 %s13, 1
        // Predicated region
        $region33: #{tpu_custom_call.1} parent=31 // pred_check
          %p171 = pneg %p72
        $region34: #{tpu_custom_call.1} parent=31 // pred_check_branch
          %173 = sbr.rel (%p171) target = $region36
        $region35: #{tpu_custom_call.1} parent=31 // pred_region
          %174 = dma.done [#allocation4], 256
        $region36: #{tpu_custom_call.1} parent=31 // pred_fallthru
          _
        %p175 = scmp.lt.s32.totalorder %s22, 1
        %s176 = scalar_select %p175, %s22, 1
        %s177 = smul.addr %s176, 3
        %s178 = smul.addr %s177, 4
        %s179 = scalar_lea.vmem %s0, %s178
        %p180 = pneg %p51
        %p181 = pneg %p48
        %p182 = pneg %p72
        %p183 = pneg %p69
        %p184 = pneg %p93
        %p185 = pneg %p90
        %p186 = pneg %p121
        %p187 = pneg %p118
        %s188 = sand.u32 %s108, 1
        %s189 = scalar_lea.sflag [#allocation5], %s188
        %s190 = sand.u32 %s108, 1
        %s191 = smul.addr %s190, 32
        %s192 = scalar_lea.vmem [#allocation6], %s191
        %p193 = scmp.lt.s32.totalorder %s22, 1
        %s194 = scalar_select %p193, %s22, 1
        %s195 = smul.addr %s194, 3
        %s196 = smul.addr %s195, 4
        %s197 = scalar_lea.vmem %s0, %s196
        %s198 = smul.u32 2, %s23
        %s202 = smul.u32 %s23, 256
        %s203 = sshra.s32 %s202, 7
        %s204 = sand.u32 %s202, 127
        %s205 = smul.addr %s203, 4
        %s206 = scalar_lea.vmem %s197, %s205
        %v207 = vld [vmem:[%s206] sm:$0xff]
        %v208 = vld [vmem:[%s206 + $0x8] sm:$0xf]
        %v209 = vlaneseq
        %v210 = vand.u32 %v209, 127
        %v211 = vadd.s32 %v210, 128
        %vm212 = vcmp.lt.s32.totalorder %v210, 0
        %v213 = vsub.s32 0, %v210
        %v214 = vsel %vm212, %v213, %v210
        %v215 = vshrl.u32 %v214, 4
        %v216 = vand.u32 %v214, 15
        %v217 = vsub.s32 0, %v216
        %v218 = vsel %vm212, %v217, %v216
        %vm219 = vcmp.lt.s32.totalorder %v211, 0
        %v220 = vsub.s32 0, %v211
        %v221 = vsel %vm219, %v220, %v211
        %v222 = vshrl.u32 %v221, 4
        %v223 = vand.u32 %v221, 15
        %v224 = vsub.s32 0, %v223
        %v225 = vsel %vm219, %v224, %v223
        %vm226 = vcmp.ne.s32.totalorder %v218, 0
        %vm227 = vcmp.ne.s32.totalorder %v225, 0
        %vm228 = vcmp.lt.s32.totalorder %v218, 0
        %vm229 = vcmp.lt.s32.totalorder %v225, 0
        %vm230 = vmand %vm228, %vm226
        %vm231 = vmand %vm229, %vm227
        %v232 = vadd.s32 %v218, 16
        %v233 = vadd.s32 %v225, 16
        %v234 = vsel %vm230, %v232, %v218
        %v235 = vsel %vm231, %v233, %v225
        %vm236 = vcmp.ge.s32.totalorder %v234, 1
        %vm237 = vcmp.ge.s32.totalorder %v235, 1
        %vm238 = vcmp.lt.s32.totalorder %v234, 15
        %vm239 = vcmp.lt.s32.totalorder %v235, 15
        %v240 = vsel %vm236, 1, 0
        %v241 = vsel %vm237, 1, 0
        %vm242 = vcmp.eq.s32.totalorder %v240, 1
        %vm243 = vcmp.eq.s32.totalorder %v241, 1
        %vm244 = vmpackc.low %vm243, %vm242
        %v245 = vsel %vm244, %v207, 0
        %v247 = vunpack.c.l.b16 %v245
        %v248 = vunpack.c.h.b16 %v245
        %v249 = vpack.c.b16 %v247, %v247
        %v250 = vpack.c.b16 %v248, %v248
        %253 = vst [vmem:[#allocation2] sm:$0xf] %v249
        %254 = vst [vmem:[#allocation2 + $0x8] sm:$0xf] %v250
        %255 = vst [vmem:[#allocation2] sm:$0xf0] 0
        %256 = vst [vmem:[#allocation2 + $0x8] sm:$0xf0] 0
        %v259 = vunpack.c.l.b16 %v207
        %v260 = vunpack.c.h.b16 %v207
        %v261 = vunpack.c.l.b16 %v208
        %v262 = vpack.c.b16 %v259, %v259
        %v263 = vpack.c.b16 %v260, %v260
        %v264 = vpack.c.b16 %v261, %v261
        %265 = vrot.lane.b32.xlu0 %v262, 127
        %v266 = vpop.permute.xlu0 %265
        %267 = vrot.lane.b32.xlu0 %v263, 127
        %v268 = vpop.permute.xlu0 %267
        %269 = vrot.lane.b32.xlu0 %v264, 127
        %v270 = vpop.permute.xlu0 %269
        %vm271 = vcmask 1039360
        %v272 = vsel %vm271, %v266, %v268
        %v273 = vsel %vm271, %v268, %v270
        %276 = vst [vmem:[#allocation2 + $0x10] sm:$0xf] %v272
        %277 = vst [vmem:[#allocation2 + $0x18] sm:$0xf] %v273
        %278 = vst [vmem:[#allocation2 + $0x10] sm:$0xf0] 0
        %279 = vst [vmem:[#allocation2 + $0x18] sm:$0xf0] 0
        %v280 = vsel %vm238, 1, 0
        %v281 = vsel %vm239, 1, 0
        %vm282 = vcmp.eq.s32.totalorder %v280, 1
        %vm283 = vcmp.eq.s32.totalorder %v281, 1
        %vm284 = vmpackc.low %vm283, %vm282
        %v285 = vsel %vm284, 65537, 0
        %286 = vrot.lane.b32.xlu0 %v285, 2
        %v287 = vpop.permute.xlu0 %286
        %v288 = vrot.slane %v287, 4
        %vm289 = vcmask 15360
        %v290 = vsel %vm289, %v288, %v287
        %vm291 = vcmp.ne.s16.totalorder %v290, 0
        %vm292 = vcmp.ne.s16.totalorder %v288, 0
        %v293 = vsel %vm291, %v207, 0
        %v294 = vsel %vm292, %v208, 0
        %v297 = vunpack.c.l.b16 %v293
        %v298 = vunpack.c.h.b16 %v293
        %v299 = vunpack.c.l.b16 %v294
        %v300 = vpack.c.b16 %v297, %v297
        %v301 = vpack.c.b16 %v298, %v298
        %v302 = vpack.c.b16 %v299, %v299
        %303 = vrot.lane.b32.xlu0 %v300, 126
        %v304 = vpop.permute.xlu0 %303
        %305 = vrot.lane.b32.xlu0 %v301, 126
        %v306 = vpop.permute.xlu0 %305
        %307 = vrot.lane.b32.xlu0 %v302, 126
        %v308 = vpop.permute.xlu0 %307
        %vm309 = vcmask 1031168
        %v310 = vsel %vm309, %v304, %v306
        %v311 = vsel %vm309, %v306, %v308
        %314 = vst [vmem:[#allocation2 + $0x20] sm:$0xf] %v310
        %315 = vst [vmem:[#allocation2 + $0x28] sm:$0xf] %v311
        %316 = vst [vmem:[#allocation2 + $0x20] sm:$0xf0] 0
        %317 = vst [vmem:[#allocation2 + $0x28] sm:$0xf0] 0
        %v318 = vsel %vm244, 65537, 0
        %319 = vrot.lane.b32.xlu0 %v318, 16
        %v320 = vpop.permute.xlu0 %319
        %v321 = vrot.slane %v320, 4
        %vm322 = vcmask 130048
        %v323 = vsel %vm322, %v321, %v320
        %vm324 = vcmp.ne.s16.totalorder %v323, 0
        %vm325 = vcmp.ne.s16.totalorder %v321, 0
        %v326 = vsel %vm324, %v207, 0
        %v327 = vsel %vm325, %v208, 0
        %v330 = vunpack.c.l.b16 %v326
        %v331 = vunpack.c.h.b16 %v326
        %v332 = vunpack.c.l.b16 %v327
        %v333 = vpack.c.b16 %v330, %v330
        %v334 = vpack.c.b16 %v331, %v331
        %v335 = vpack.c.b16 %v332, %v332
        %336 = vrot.lane.b32.xlu0 %v333, 112
        %v337 = vpop.permute.xlu0 %336
        %338 = vrot.lane.b32.xlu0 %v334, 112
        %v339 = vpop.permute.xlu0 %338
        %340 = vrot.lane.b32.xlu0 %v335, 112
        %v341 = vpop.permute.xlu0 %340
        %vm342 = vcmask 916480
        %v343 = vsel %vm342, %v337, %v339
        %v344 = vsel %vm342, %v339, %v341
        %347 = vst [vmem:[#allocation2 + $0x30] sm:$0xf] %v343
        %348 = vst [vmem:[#allocation2 + $0x38] sm:$0xf] %v344
        %349 = vst [vmem:[#allocation2 + $0x30] sm:$0xf0] 0
        %350 = vst [vmem:[#allocation2 + $0x38] sm:$0xf0] 0
        %351 = vrot.lane.b32.xlu0 %v262, 111
        %v352 = vpop.permute.xlu0 %351
        %353 = vrot.lane.b32.xlu0 %v263, 111
        %v354 = vpop.permute.xlu0 %353
        %355 = vrot.lane.b32.xlu0 %v264, 111
        %v356 = vpop.permute.xlu0 %355
        %vm357 = vcmask 908288
        %v358 = vsel %vm357, %v352, %v354
        %v359 = vsel %vm357, %v354, %v356
        %362 = vst [vmem:[#allocation2 + $0x40] sm:$0xf] %v358
        %363 = vst [vmem:[#allocation2 + $0x48] sm:$0xf] %v359
        %364 = vst [vmem:[#allocation2 + $0x40] sm:$0xf0] 0
        %365 = vst [vmem:[#allocation2 + $0x48] sm:$0xf0] 0
        %366 = vrot.lane.b32.xlu0 %v285, 18
        %v367 = vpop.permute.xlu0 %366
        %v368 = vrot.slane %v367, 4
        %vm369 = vcmask 146432
        %v370 = vsel %vm369, %v368, %v367
        %vm371 = vcmp.ne.s16.totalorder %v370, 0
        %vm372 = vcmp.ne.s16.totalorder %v368, 0
        %v373 = vsel %vm371, %v207, 0
        %v374 = vsel %vm372, %v208, 0
        %v377 = vunpack.c.l.b16 %v373
        %v378 = vunpack.c.h.b16 %v373
        %v379 = vunpack.c.l.b16 %v374
        %v380 = vpack.c.b16 %v377, %v377
        %v381 = vpack.c.b16 %v378, %v378
        %v382 = vpack.c.b16 %v379, %v379
        %383 = vrot.lane.b32.xlu0 %v380, 110
        %v384 = vpop.permute.xlu0 %383
        %385 = vrot.lane.b32.xlu0 %v381, 110
        %v386 = vpop.permute.xlu0 %385
        %387 = vrot.lane.b32.xlu0 %v382, 110
        %v388 = vpop.permute.xlu0 %387
        %vm389 = vcmask 900096
        %v390 = vsel %vm389, %v384, %v386
        %v391 = vsel %vm389, %v386, %v388
        %394 = vst [vmem:[#allocation2 + $0x50] sm:$0xf] %v390
        %395 = vst [vmem:[#allocation2 + $0x58] sm:$0xf] %v391
        %396 = vst [vmem:[#allocation2 + $0x50] sm:$0xf0] 0
        %397 = vst [vmem:[#allocation2 + $0x58] sm:$0xf0] 0
        %398 = vrot.lane.b32.xlu0 %v318, 32
        %v399 = vpop.permute.xlu0 %398
        %v400 = vrot.slane %v399, 4
        %vm401 = vcmask 261120
        %v402 = vsel %vm401, %v400, %v399
        %vm403 = vcmp.ne.s16.totalorder %v402, 0
        %vm404 = vcmp.ne.s16.totalorder %v400, 0
        %v405 = vsel %vm403, %v207, 0
        %v406 = vsel %vm404, %v208, 0
        %v409 = vunpack.c.l.b16 %v405
        %v410 = vunpack.c.h.b16 %v405
        %v411 = vunpack.c.l.b16 %v406
        %v412 = vpack.c.b16 %v409, %v409
        %v413 = vpack.c.b16 %v410, %v410
        %v414 = vpack.c.b16 %v411, %v411
        %415 = vrot.lane.b32.xlu0 %v412, 96
        %v416 = vpop.permute.xlu0 %415
        %417 = vrot.lane.b32.xlu0 %v413, 96
        %v418 = vpop.permute.xlu0 %417
        %419 = vrot.lane.b32.xlu0 %v414, 96
        %v420 = vpop.permute.xlu0 %419
        %vm421 = vcmask 785408
        %v422 = vsel %vm421, %v416, %v418
        %v423 = vsel %vm421, %v418, %v420
        %426 = vst [vmem:[#allocation2 + $0x60] sm:$0xf] %v422
        %427 = vst [vmem:[#allocation2 + $0x68] sm:$0xf] %v423
        %428 = vst [vmem:[#allocation2 + $0x60] sm:$0xf0] 0
        %429 = vst [vmem:[#allocation2 + $0x68] sm:$0xf0] 0
        %430 = vrot.lane.b32.xlu0 %v262, 95
        %v431 = vpop.permute.xlu0 %430
        %432 = vrot.lane.b32.xlu0 %v263, 95
        %v433 = vpop.permute.xlu0 %432
        %434 = vrot.lane.b32.xlu0 %v264, 95
        %v435 = vpop.permute.xlu0 %434
        %vm436 = vcmask 777216
        %v437 = vsel %vm436, %v431, %v433
        %v438 = vsel %vm436, %v433, %v435
        %441 = vst [vmem:[#allocation2 + $0x70] sm:$0xf] %v437
        %442 = vst [vmem:[#allocation2 + $0x78] sm:$0xf] %v438
        %443 = vst [vmem:[#allocation2 + $0x70] sm:$0xf0] 0
        %444 = vst [vmem:[#allocation2 + $0x78] sm:$0xf0] 0
        %445 = vrot.lane.b32.xlu0 %v285, 34
        %v446 = vpop.permute.xlu0 %445
        %v447 = vrot.slane %v446, 4
        %vm448 = vcmask 277504
        %v449 = vsel %vm448, %v447, %v446
        %vm450 = vcmp.ne.s16.totalorder %v449, 0
        %vm451 = vcmp.ne.s16.totalorder %v447, 0
        %v452 = vsel %vm450, %v207, 0
        %v453 = vsel %vm451, %v208, 0
        %v456 = vunpack.c.l.b16 %v452
        %v457 = vunpack.c.h.b16 %v452
        %v458 = vunpack.c.l.b16 %v453
        %v459 = vpack.c.b16 %v456, %v456
        %v460 = vpack.c.b16 %v457, %v457
        %v461 = vpack.c.b16 %v458, %v458
        %462 = vrot.lane.b32.xlu0 %v459, 94
        %v463 = vpop.permute.xlu0 %462
        %464 = vrot.lane.b32.xlu0 %v460, 94
        %v465 = vpop.permute.xlu0 %464
        %466 = vrot.lane.b32.xlu0 %v461, 94
        %v467 = vpop.permute.xlu0 %466
        %vm468 = vcmask 769024
        %v469 = vsel %vm468, %v463, %v465
        %v470 = vsel %vm468, %v465, %v467
        %473 = vst [vmem:[#allocation2 + $0x80] sm:$0xf] %v469
        %474 = vst [vmem:[#allocation2 + $0x88] sm:$0xf] %v470
        %475 = vst [vmem:[#allocation2 + $0x80] sm:$0xf0] 0
        %476 = vst [vmem:[#allocation2 + $0x88] sm:$0xf0] 0
        %v477 = vld [vmem:[#allocation3] sm:$0xff]
        %v478 = vld [vmem:[#allocation3 + $0x8] sm:$0xff]
        %v479 = vld [vmem:[#allocation2] sm:$0xff]
        %v480 = vld [vmem:[#allocation2 + $0x8] sm:$0xff]
        %v481 = vld [vmem:[#allocation2 + $0x10] sm:$0xff]
        %v482 = vld [vmem:[#allocation2 + $0x18] sm:$0xff]
        %v483 = vld [vmem:[#allocation2 + $0x20] sm:$0xff]
        %v484 = vld [vmem:[#allocation2 + $0x28] sm:$0xff]
        %v485 = vld [vmem:[#allocation2 + $0x30] sm:$0xff]
        %v486 = vld [vmem:[#allocation2 + $0x38] sm:$0xff]
        %v487 = vld [vmem:[#allocation2 + $0x40] sm:$0xff]
        %v488 = vld [vmem:[#allocation2 + $0x48] sm:$0xff]
        %v489 = vld [vmem:[#allocation2 + $0x50] sm:$0xff]
        %v490 = vld [vmem:[#allocation2 + $0x58] sm:$0xff]
        %v491 = vld [vmem:[#allocation2 + $0x60] sm:$0xff]
        %v492 = vld [vmem:[#allocation2 + $0x68] sm:$0xff]
        %v493 = vld [vmem:[#allocation2 + $0x70] sm:$0xff]
        %v494 = vld [vmem:[#allocation2 + $0x78] sm:$0xff]
        %v495 = vld [vmem:[#allocation2 + $0x80] sm:$0xff]
        %v496 = vld [vmem:[#allocation2 + $0x88] sm:$0xff]
        %v497 = vld [vmem:[%s2] sm:$0xff]
        %v498 = vld [vmem:[%s2 + $0x8] sm:$0xff]
        %500 = vset.pattern.permute.xlu0 0
        %501 = vperm.xlu0 %500, %v497
        %v502 = vpop.permute.xlu0 %501
        %505 = vset.pattern.permute.xlu0 0
        %506 = vperm.xlu0 %505, %v498
        %v507 = vpop.permute.xlu0 %506
        %v511 = vunpack.c.l.b16 %v477
        %v512 = vunpack.c.h.b16 %v477
        %v513 = vunpack.c.l.b16 %v478
        %v514 = vunpack.c.h.b16 %v478
        %v515 = vpack.c.b16 %v513, %v511
        %v516 = vpack.c.b16 %v514, %v512
        %vm518 = vcmask 130048
        %v520 = vsel %vm518, %v516, 0
        %522 = vmatprep.subr.bf16.mxu0 %v480
        %523 = vmatpush1.bf16.msra.mxu0 %v479
        %524 = vmatprep.subr.bf16.mxu0 %v482
        %525 = vmatpush1.bf16.msra.mxu0 %v481
        %526 = vmatprep.subr.bf16.mxu0 %v484
        %527 = vmatpush1.bf16.msra.mxu0 %v483
        %528 = vmatprep.subr.bf16.mxu0 %v486
        %529 = vmatpush1.bf16.msra.mxu0 %v485
        %530 = vmatprep.subr.bf16.mxu0 %v488
        %531 = vmatpush1.bf16.msra.mxu0 %v487
        %532 = vmatprep.subr.bf16.mxu0 %v490
        %533 = vmatpush1.bf16.msra.mxu0 %v489
        %534 = vmatprep.subr.bf16.mxu0 %v492
        %535 = vmatpush1.bf16.msra.mxu0 %v491
        %536 = vmatprep.subr.bf16.mxu0 %v494
        %537 = vmatpush1.bf16.msra.mxu0 %v493
        %538 = vmatprep.subr.bf16.mxu0 %v496
        %539 = vmatpush1.bf16.msra.mxu0 %v495
        %540 = vmatprep.subr.bf16.mxu0 0
        %541 = vmatpush1.bf16.msra.mxu0 0
        %542 = vmatprep.subr.bf16.mxu0 0
        %543 = vmatpush1.bf16.msra.mxu0 0
        %544 = vmatprep.subr.bf16.mxu0 0
        %545 = vmatpush1.bf16.msra.mxu0 0
        %546 = vmatprep.subr.bf16.mxu0 0
        %547 = vmatpush1.bf16.msra.mxu0 0
        %548 = vmatprep.subr.bf16.mxu0 0
        %549 = vmatpush1.bf16.msra.mxu0 0
        %550 = vmatprep.subr.bf16.mxu0 0
        %551 = vmatpush1.bf16.msra.mxu0 0
        %552 = vmatprep.subr.bf16.mxu0 0
        %553 = vmatpush1.bf16.msra.mxu0 0
        %554 = vmatprep.mubr.bf16.mxu0 %v520
        %555 = vmatmul.mubr.bf16.gmra.mrb[0].mxu0 %v515
        %v556 = vpop.f32.mrb[0].mxu0
        %v557 = vadd.f32 %v502, %v556
        %v558 = vpop.f32.mrb[0].mxu0
        %v559 = vadd.f32 %v502, %v558
        %v560 = vpop.f32.mrb[0].mxu0
        %v561 = vadd.f32 %v507, %v560
        %v562 = vpop.f32.mrb[0].mxu0
        %v563 = vadd.f32 %v507, %v562
        %564 = vdwg.mxu0
        %v565 = vld [vmem:[%s2 + $0x10] sm:$0x1]
        %vm566 = vcmp.ge.f32.partialorder %v557, 0.0
        %vm567 = vcmp.ge.f32.partialorder %v559, 0.0
        %vm568 = vcmp.ge.f32.partialorder %v561, 0.0
        %vm569 = vcmp.ge.f32.partialorder %v563, 0.0
        %s571 = vtos %v565
        %v572 = vstv %s571
        %v574 = vmul.f32 %v572, %v557
        %v575 = vmul.f32 %v572, %v559
        %v576 = vmul.f32 %v572, %v561
        %v577 = vmul.f32 %v572, %v563
        %v578 = vsel %vm566, %v557, %v574
        %v579 = vsel %vm567, %v559, %v575
        %v580 = vsel %vm568, %v561, %v576
        %v581 = vsel %vm569, %v563, %v577
        %582 = vst [vmem:[%s192] sm:$0xff] %v578
        %583 = vst [vmem:[%s192 + $0x8] sm:$0xff] %v579
        %584 = vst [vmem:[%s192 + $0x10] sm:$0xff] %v580
        %585 = vst [vmem:[%s192 + $0x18] sm:$0xff] %v581
        %s586 = sand.u32 %s108, 1
        %s587 = scalar_lea.sflag [#allocation5], %s586
        %s588 = sand.u32 %s108, 1
        %s589 = smul.addr %s588, 32
        %s590 = scalar_lea.vmem [#allocation6], %s589
        // Predicated region
        $region37: #{tpu_custom_call.1} parent=31 // pred_check
          %p591 = pneg %p118
        $region38: #{tpu_custom_call.1} parent=31 // pred_check_branch
          %593 = sbr.rel (%p591) target = $region40
        $region39: #{tpu_custom_call.1} parent=31 // pred_region
          %s594 = smul.u32 2, %s23
          %s596 = ssub.s32 512, 512
          %597 = vsyncadd %s587, %s596
          %s598 = smul.addr %s22, 4
          %s599 = sadd.s32 %s594, %s598
          %s600 = smul.addr %s599, 128
          %s601 = scalar_lea.hbm %s3, %s600
          %s602 = sshll.u32 %s590, 4
          %s603 = int_to_ptr.vmem [resolvable:$true] %s602
          %608 = dma.vmem_to_hbm [thread:$0]  %s603, 512, %s601, %s587, 256, 256, 16
        $region40: #{tpu_custom_call.1} parent=31 // pred_fallthru
          _
      $region32: #{tpu_custom_call.1} parent=5 // pred_fallthru
        _
      %p609 = scmp.le.s32.totalorder 2, %s13
      // Predicated region
      $region41: #{tpu_custom_call.1} parent=5 // pred_check
        %p610 = pneg %p609
      $region42: #{tpu_custom_call.1} parent=5 // pred_check_branch
        %612 = sbr.rel (%p610) target = $region44
      $region43: #{tpu_custom_call.1} parent=5 // pred_region
        %s613 = ssub.s32 %s13, 2
        // Predicated region
        $region45: #{tpu_custom_call.1} parent=43 // pred_check
          %p614 = pneg %p124
        $region46: #{tpu_custom_call.1} parent=43 // pred_check_branch
          %616 = sbr.rel (%p614) target = $region48
        $region47: #{tpu_custom_call.1} parent=43 // pred_region
          %s617 = sand.u32 %s109, 1
          %s618 = scalar_lea.sflag [#allocation5], %s617
          %s619 = sand.u32 %s109, 1
          %s620 = smul.addr %s619, 32
          %s621 = scalar_lea.vmem [#allocation6], %s620
          %622 = dma.done %s618, 512
        $region48: #{tpu_custom_call.1} parent=43 // pred_fallthru
          _
      $region44: #{tpu_custom_call.1} parent=5 // pred_fallthru
        _
    $region6: #{tpu_custom_call.1} parent=1 // loop_footer
      %s17 = sadd.s32 1, %s13
    $region7: #{tpu_custom_call.1} parent=1 // loop_footer_branch
      %12 = sbr.rel target = $region3
    $region8: #{tpu_custom_call.1} parent=1 // loop_exit
      _
    %623 = vsyncpa [#allocation4], 1
    %s624 = scalar_lea.sflag [#allocation4], 1
    %625 = vsyncpa %s624, 1
    %626 = vsyncpa [#allocation5], 1
    %s627 = scalar_lea.sflag [#allocation5], 1
    %628 = vsyncpa %s627, 1

</llo_original>
